<compile_context>
chip_gen: v7x
topology: tpu7x:2x2x1
jax: 0.10.0
libtpu: 0.0.40
codegen_flags: <defaults>
</compile_context>

<pallas_src>
import functools

import jax
import jax.numpy as jnp
import numpy as np
from jax.experimental import pallas as pl
from jax.experimental.pallas import tpu as pltpu

_LANE = 128       # lane width (last-dim padding target)
_TM_MAX = 1024    # row tile of A_hat
_TK_MAX = 1024    # reduction tile of A_hat
_FUSE_VMEM_BUDGET = 8 * 1024 * 1024   # use the fused single-call path below this


def _round_up(x, m):
    return (x + m - 1) // m * m


def _pad2d(a, rows, cols):
    r, c = a.shape
    return jnp.pad(a, ((0, rows - r), (0, cols - c)))


def _choose_tiling(n):
    """Returns (n_pad, tm, tk) with tm, tk dividing n_pad; >=2 row tiles when possible."""
    n_pad = _round_up(n, _LANE)
    if n_pad <= _TM_MAX:
        # Split into two row tiles (megacore) as soon as we have >= 256 rows.
        tm = n_pad // 2 if n_pad >= 2 * _LANE else n_pad
        tk = n_pad
        return n_pad, tm, tk
    n_pad = _round_up(n, _TM_MAX)
    return n_pad, _TM_MAX, _TK_MAX


# ----------------------------------------------------------------------------
# Kernel 1: per-layer projection  H = X @ W   (bf16 out, f32 MXU accumulate)
# ----------------------------------------------------------------------------
def _project_kernel(x_ref, w_ref, h_ref):
    h_ref[...] = jnp.dot(
        x_ref[...], w_ref[...], preferred_element_type=jnp.float32
    ).astype(h_ref.dtype)


def _project(x_bf16, w_bf16, *, tm):
    n_pad, f_in_pad = x_bf16.shape
    f_out_pad = w_bf16.shape[1]
    return pl.pallas_call(
        _project_kernel,
        out_shape=jax.ShapeDtypeStruct((n_pad, f_out_pad), jnp.bfloat16),
        grid_spec=pltpu.PrefetchScalarGridSpec(
            num_scalar_prefetch=0,
            grid=(n_pad // tm,),
            in_specs=[
                pl.BlockSpec((tm, f_in_pad), lambda i: (i, 0)),         # X row tile
                pl.BlockSpec((f_in_pad, f_out_pad), lambda i: (0, 0)),  # W resident
            ],
            out_specs=pl.BlockSpec((tm, f_out_pad), lambda i: (i, 0)),
        ),
        compiler_params=pltpu.CompilerParams(dimension_semantics=("parallel",)),
    )(x_bf16, w_bf16)


# ----------------------------------------------------------------------------
# Kernel 2: aggregation  Y = A_hat @ H + b  (optional ReLU)
# Two variants: accumulate directly into the f32 output block (last layer), or
# into an f32 VMEM scratch when the output is bf16 (hidden layers).
# ----------------------------------------------------------------------------
def _agg_kernel_inplace(a_ref, h_ref, b_ref, o_ref, *, apply_relu):
    k = pl.program_id(1)

    @pl.when(k == 0)
    def _init():
        o_ref[...] = jnp.zeros_like(o_ref)

    o_ref[...] += jnp.dot(a_ref[...], h_ref[...], preferred_element_type=jnp.float32)

    @pl.when(k == pl.num_programs(1) - 1)
    def _finalize():
        y = o_ref[...] + b_ref[...]
        if apply_relu:
            y = jnp.maximum(y, 0.0)
        o_ref[...] = y


def _agg_kernel_acc(a_ref, h_ref, b_ref, o_ref, acc_ref, *, apply_relu):
    k = pl.program_id(1)

    @pl.when(k == 0)
    def _init():
        acc_ref[...] = jnp.zeros_like(acc_ref)

    acc_ref[...] += jnp.dot(a_ref[...], h_ref[...], preferred_element_type=jnp.float32)

    @pl.when(k == pl.num_programs(1) - 1)
    def _finalize():
        y = acc_ref[...] + b_ref[...]
        if apply_relu:
            y = jnp.maximum(y, 0.0)
        o_ref[...] = y.astype(o_ref.dtype)


def _aggregate(a_hat_bf16, h_bf16, b_f32, *, apply_relu, out_dtype, tm, tk):
    n_pad = a_hat_bf16.shape[0]
    f_out_pad = h_bf16.shape[1]
    grid = (n_pad // tm, n_pad // tk)
    use_inplace = np.dtype(out_dtype) == np.dtype(np.float32)
    if use_inplace:
        kernel = functools.partial(_agg_kernel_inplace, apply_relu=apply_relu)
        scratch = []
    else:
        kernel = functools.partial(_agg_kernel_acc, apply_relu=apply_relu)
        scratch = [pltpu.VMEM((tm, f_out_pad), jnp.float32)]
    return pl.pallas_call(
        kernel,
        out_shape=jax.ShapeDtypeStruct((n_pad, f_out_pad), out_dtype),
        grid_spec=pltpu.PrefetchScalarGridSpec(
            num_scalar_prefetch=0,
            grid=grid,
            in_specs=[
                pl.BlockSpec((tm, tk), lambda i, k: (i, k)),           # A_hat tile
                pl.BlockSpec((tk, f_out_pad), lambda i, k: (k, 0)),    # H K-slab
                pl.BlockSpec((1, f_out_pad), lambda i, k: (0, 0)),     # bias resident
            ],
            out_specs=pl.BlockSpec((tm, f_out_pad), lambda i, k: (i, 0)),
            scratch_shapes=scratch,
        ),
        compiler_params=pltpu.CompilerParams(
            dimension_semantics=("parallel", "arbitrary"),
        ),
    )(a_hat_bf16, h_bf16, b_f32)


# ----------------------------------------------------------------------------
# Kernel 3: fused multi-layer forward for small graphs (everything VMEM-resident)
# ----------------------------------------------------------------------------
def _fused_forward_kernel(*refs, num_layers):
    a_ref, x_ref = refs[0], refs[1]
    o_ref = refs[-1]
    a = a_ref[...]
    h = x_ref[...]
    for li in range(num_layers):
        w = refs[2 + 2 * li][...]
        b = refs[3 + 2 * li][...]
        p = jnp.dot(h, w, preferred_element_type=jnp.float32)
        y = jnp.dot(a, p.astype(jnp.bfloat16), preferred_element_type=jnp.float32) + b
        if li < num_layers - 1:
            h = jnp.maximum(y, 0.0).astype(jnp.bfloat16)
        else:
            o_ref[...] = y.astype(o_ref.dtype)


def _fused_forward(a_hat_bf16, x_bf16, padded_params):
    n_pad = a_hat_bf16.shape[0]
    f_out_pad = padded_params[-1][0].shape[1]
    num_layers = len(padded_params)
    operands = [a_hat_bf16, x_bf16]
    in_specs = [
        pl.BlockSpec(a_hat_bf16.shape, lambda i: (0, 0)),
        pl.BlockSpec(x_bf16.shape, lambda i: (0, 0)),
    ]
    for w_pad, b_pad in padded_params:
        operands += [w_pad, b_pad]
        in_specs += [
            pl.BlockSpec(w_pad.shape, lambda i: (0, 0)),
            pl.BlockSpec(b_pad.shape, lambda i: (0, 0)),
        ]
    return pl.pallas_call(
        functools.partial(_fused_forward_kernel, num_layers=num_layers),
        out_shape=jax.ShapeDtypeStruct((n_pad, f_out_pad), jnp.float32),
        grid_spec=pltpu.PrefetchScalarGridSpec(
            num_scalar_prefetch=0,
            grid=(1,),
            in_specs=in_specs,
            out_specs=pl.BlockSpec((n_pad, f_out_pad), lambda i: (0, 0)),
        ),
        compiler_params=pltpu.CompilerParams(dimension_semantics=("arbitrary",)),
    )(*operands)


def _fused_footprint_bytes(n_pad, f_in_pad, padded_params):
    total = n_pad * n_pad * 2 + n_pad * f_in_pad * 2
    for w_pad, b_pad in padded_params:
        total += w_pad.size * 2 + b_pad.size * 4
        total += n_pad * w_pad.shape[1] * 4          # activation temporary
    total += n_pad * padded_params[-1][0].shape[1] * 4   # output
    return total


# ----------------------------------------------------------------------------
# Glue: dense normalized adjacency A_hat from edge_index (GCNConv norm)
# ----------------------------------------------------------------------------
def build_normalized_adjacency(edge_index, num_nodes):
    row, col = edge_index[0], edge_index[1]
    loop = jnp.arange(num_nodes, dtype=row.dtype)
    row = jnp.concatenate([row, loop])
    col = jnp.concatenate([col, loop])
    ew = jnp.ones_like(row, dtype=jnp.float32)
    deg = jnp.zeros((num_nodes,), jnp.float32).at[col].add(ew)
    deg_inv_sqrt = jnp.where(deg > 0, 1.0 / jnp.sqrt(deg), 0.0)
    norm = deg_inv_sqrt[row] * ew * deg_inv_sqrt[col]
    # out[col] += norm * x[row]  =>  A_hat[col, row] += norm
    a_hat = jnp.zeros((num_nodes, num_nodes), jnp.float32).at[col, row].add(norm)
    return a_hat


# ----------------------------------------------------------------------------
# Parameters (Glorot-uniform weights, zero biases — GCNConv defaults)
# ----------------------------------------------------------------------------
def init_params(key, input_size, hidden_size, num_layers, output_size):
    dims = [input_size] + [hidden_size] * (num_layers - 1) + [output_size]
    params = []
    for i in range(num_layers):
        key, sub = jax.random.split(key)
        fan_in, fan_out = dims[i], dims[i + 1]
        limit = np.sqrt(6.0 / (fan_in + fan_out))
        w = jax.random.uniform(sub, (fan_in, fan_out), jnp.float32, -limit, limit)
        b = jnp.zeros((1, fan_out), jnp.float32)
        params.append((w, b))
    return params


# ----------------------------------------------------------------------------
# my_GCN forward (JAX/Pallas)
# ----------------------------------------------------------------------------
def my_gcn_forward(x_chunks, edge_index, params, *, force_tiled=False):
    # torch: x = torch.from_numpy(np.concatenate(x)).float()
    x = jnp.concatenate([jnp.asarray(c, jnp.float32) for c in x_chunks], axis=0)
    n, f_in = x.shape
    out_size = params[-1][0].shape[1]
    n_pad, tm, tk = _choose_tiling(n)

    a_hat = build_normalized_adjacency(edge_index, n)
    a_hat = _pad2d(a_hat, n_pad, n_pad).astype(jnp.bfloat16)

    f_in_pad = _round_up(f_in, _LANE)
    x_pad = _pad2d(x, n_pad, f_in_pad).astype(jnp.bfloat16)

    # Zero-pad weights/bias: padded rows/cols contribute nothing, so the padded
    # columns of each layer's output stay exactly zero through ReLU.
    padded_params = []
    d_in = f_in_pad
    for w, b in params:
        f_out_pad = _round_up(w.shape[1], _LANE)
        w_pad = _pad2d(w, d_in, f_out_pad).astype(jnp.bfloat16)
        b_pad = _pad2d(b, 1, f_out_pad).astype(jnp.float32)
        padded_params.append((w_pad, b_pad))
        d_in = f_out_pad

    use_fused = (not force_tiled) and (
        _fused_footprint_bytes(n_pad, f_in_pad, padded_params) <= _FUSE_VMEM_BUDGET
    )

    if use_fused:
        out = _fused_forward(a_hat, x_pad, padded_params)
    else:
        num_layers = len(padded_params)
        h_in = x_pad
        out = None
        for li, (w_pad, b_pad) in enumerate(padded_params):
            is_last = li == num_layers - 1
            h = _project(h_in, w_pad, tm=tm)                          # H = X @ W
            out_dtype = jnp.float32 if is_last else jnp.bfloat16
            out = _aggregate(
                a_hat, h, b_pad,
                apply_relu=not is_last, out_dtype=out_dtype, tm=tm, tk=tk,
            )                                                          # A_hat @ H + b
            h_in = out
    return out[:n, :out_size]


def my_gcn_reference(x_chunks, edge_index, params):
    x = jnp.concatenate([jnp.asarray(c, jnp.float32) for c in x_chunks], axis=0)
    a_hat = build_normalized_adjacency(edge_index, x.shape[0])
    num_layers = len(params)
    for li, (w, b) in enumerate(params):
        x = a_hat @ (x @ w) + b
        if li < num_layers - 1:
            x = jnp.maximum(x, 0.0)
    return x


if __name__ == "__main__":
    key = jax.random.PRNGKey(0)

    # Small shapes consistent with the module's forward:
    #   input_size=4, hidden_size=32, num_layers=2, output_size=8, N=16 nodes
    input_size, hidden_size, num_layers, output_size = 4, 32, 2, 8
    num_nodes = 16

    # Node features arrive as a list of chunks (mirrors np.concatenate(x))
    key, k1, k2 = jax.random.split(key, 3)
    x_chunks = [
        jax.random.normal(k1, (num_nodes // 2, input_size), jnp.float32),
        jax.random.normal(k2, (num_nodes // 2, input_size), jnp.float32),
    ]

    # Deterministic edge_index: bidirectional ring graph, shape [2, 2*N]
    src = np.arange(num_nodes)
    dst = (src + 1) % num_nodes
    edge_index = jnp.asarray(
        np.stack([np.concatenate([src, dst]), np.concatenate([dst, src])]),
        dtype=jnp.int32,
    )

    params = init_params(key, input_size, hidden_size, num_layers, output_size)

    ref = jax.block_until_ready(my_gcn_reference(x_chunks, edge_index, params))

    # Fused small-graph path (default at this size).
    out = jax.block_until_ready(my_gcn_forward(x_chunks, edge_index, params))
    assert out.shape == (num_nodes, output_size), out.shape
    assert jnp.all(jnp.isfinite(out))
    assert np.allclose(np.asarray(out), np.asarray(ref), rtol=1e-1, atol=1e-1), (
        np.max(np.abs(np.asarray(out) - np.asarray(ref)))
    )

    # Also exercise the tiled (projection + aggregation) path.
    out_tiled = jax.block_until_ready(
        my_gcn_forward(x_chunks, edge_index, params, force_tiled=True)
    )
    assert out_tiled.shape == (num_nodes, output_size), out_tiled.shape
    assert jnp.all(jnp.isfinite(out_tiled))
    assert np.allclose(np.asarray(out_tiled), np.asarray(ref), rtol=1e-1, atol=1e-1), (
        np.max(np.abs(np.asarray(out_tiled) - np.asarray(ref)))
    )

    print("KERNEL_OK")
</pallas_src>

<mosaic_0001>
module attributes {stable_mosaic.version = 11 : i64} {
  func.func @_fused_forward_kernel(%arg0: i32, %arg1: memref<128x128xbf16, #tpu.memory_space<vmem>>, %arg2: memref<128x128xbf16, #tpu.memory_space<vmem>>, %arg3: memref<128x128xbf16, #tpu.memory_space<vmem>>, %arg4: memref<1x128xf32, #tpu.memory_space<vmem>>, %arg5: memref<128x128xbf16, #tpu.memory_space<vmem>>, %arg6: memref<1x128xf32, #tpu.memory_space<vmem>>, %arg7: memref<128x128xf32, #tpu.memory_space<vmem>>) attributes {dimension_semantics = [#tpu.dimension_semantics<arbitrary>], iteration_bounds = array<i64: 1>, scalar_prefetch = 0 : i64, scratch_operands = 0 : i64, tpu.core_type = #tpu.core_type<tc>, window_params = [{pipeline_mode = #tpu.pipeline_mode<synchronous>, transform_indices = @transform_0, window_bounds = array<i64: 128, 128>}, {pipeline_mode = #tpu.pipeline_mode<synchronous>, transform_indices = @transform_1, window_bounds = array<i64: 128, 128>}, {pipeline_mode = #tpu.pipeline_mode<synchronous>, transform_indices = @transform_2, window_bounds = array<i64: 128, 128>}, {pipeline_mode = #tpu.pipeline_mode<synchronous>, transform_indices = @transform_3, window_bounds = array<i64: 1, 128>}, {pipeline_mode = #tpu.pipeline_mode<synchronous>, transform_indices = @transform_4, window_bounds = array<i64: 128, 128>}, {pipeline_mode = #tpu.pipeline_mode<synchronous>, transform_indices = @transform_5, window_bounds = array<i64: 1, 128>}, {pipeline_mode = #tpu.pipeline_mode<synchronous>, transform_indices = @transform_6, window_bounds = array<i64: 128, 128>}]} {
    %c0 = arith.constant 0 : index
    %c0_0 = arith.constant 0 : index
    %0 = vector.load %arg1[%c0, %c0_0] : memref<128x128xbf16, #tpu.memory_space<vmem>>, vector<128x128xbf16>
    %c0_1 = arith.constant 0 : index
    %c0_2 = arith.constant 0 : index
    %1 = vector.load %arg2[%c0_1, %c0_2] : memref<128x128xbf16, #tpu.memory_space<vmem>>, vector<128x128xbf16>
    %c0_3 = arith.constant 0 : index
    %c0_4 = arith.constant 0 : index
    %2 = vector.load %arg3[%c0_3, %c0_4] : memref<128x128xbf16, #tpu.memory_space<vmem>>, vector<128x128xbf16>
    %c0_5 = arith.constant 0 : index
    %c0_6 = arith.constant 0 : index
    %3 = vector.load %arg4[%c0_5, %c0_6] : memref<1x128xf32, #tpu.memory_space<vmem>>, vector<1x128xf32>
    %cst = arith.constant dense<0.000000e+00> : vector<128x128xf32>
    %4 = tpu.matmul %1, %2, %cst {dimension_numbers = #tpu.dot_dimension_numbers<[1], [0], [0], [1], [0, 0, 1, 1], [], []>} : vector<128x128xbf16>, vector<128x128xbf16>, vector<128x128xf32> -> vector<128x128xf32>
    %5 = arith.truncf %4 : vector<128x128xf32> to vector<128x128xbf16>
    %cst_7 = arith.constant dense<0.000000e+00> : vector<128x128xf32>
    %6 = tpu.matmul %0, %5, %cst_7 {dimension_numbers = #tpu.dot_dimension_numbers<[1], [0], [0], [1], [0, 0, 1, 1], [], []>} : vector<128x128xbf16>, vector<128x128xbf16>, vector<128x128xf32> -> vector<128x128xf32>
    %7 = vector.broadcast %3 : vector<1x128xf32> to vector<128x128xf32>
    %8 = arith.addf %6, %7 : vector<128x128xf32>
    %cst_8 = arith.constant 0.000000e+00 : f32
    %9 = vector.broadcast %cst_8 : f32 to vector<128x128xf32>
    %10 = arith.maximumf %8, %9 : vector<128x128xf32>
    %11 = arith.truncf %10 : vector<128x128xf32> to vector<128x128xbf16>
    %c0_9 = arith.constant 0 : index
    %c0_10 = arith.constant 0 : index
    %12 = vector.load %arg5[%c0_9, %c0_10] : memref<128x128xbf16, #tpu.memory_space<vmem>>, vector<128x128xbf16>
    %c0_11 = arith.constant 0 : index
    %c0_12 = arith.constant 0 : index
    %13 = vector.load %arg6[%c0_11, %c0_12] : memref<1x128xf32, #tpu.memory_space<vmem>>, vector<1x128xf32>
    %cst_13 = arith.constant dense<0.000000e+00> : vector<128x128xf32>
    %14 = tpu.matmul %11, %12, %cst_13 {dimension_numbers = #tpu.dot_dimension_numbers<[1], [0], [0], [1], [0, 0, 1, 1], [], []>} : vector<128x128xbf16>, vector<128x128xbf16>, vector<128x128xf32> -> vector<128x128xf32>
    %15 = arith.truncf %14 : vector<128x128xf32> to vector<128x128xbf16>
    %cst_14 = arith.constant dense<0.000000e+00> : vector<128x128xf32>
    %16 = tpu.matmul %0, %15, %cst_14 {dimension_numbers = #tpu.dot_dimension_numbers<[1], [0], [0], [1], [0, 0, 1, 1], [], []>} : vector<128x128xbf16>, vector<128x128xbf16>, vector<128x128xf32> -> vector<128x128xf32>
    %17 = vector.broadcast %13 : vector<1x128xf32> to vector<128x128xf32>
    %18 = arith.addf %16, %17 : vector<128x128xf32>
    %c0_15 = arith.constant 0 : index
    %c0_16 = arith.constant 0 : index
    %19 = vector.load %arg7[%c0_15, %c0_16] : memref<128x128xf32, #tpu.memory_space<vmem>>, vector<128x128xf32>
    tpu.vector_store %arg7[%c0_15, %c0_16], %18 {strides = array<i32>} : memref<128x128xf32, #tpu.memory_space<vmem>>, vector<128x128xf32>,
    return
  }
  func.func @transform_0(%arg0: i32) -> (i32, i32) {
    %c0_i32 = arith.constant 0 : i32
    %c0_i32_0 = arith.constant 0 : i32
    %c0_i32_1 = arith.constant 0 : i32
    return %c0_i32, %c0_i32_0 : i32, i32
  }
  func.func @transform_1(%arg0: i32) -> (i32, i32) {
    %c0_i32 = arith.constant 0 : i32
    %c0_i32_0 = arith.constant 0 : i32
    %c0_i32_1 = arith.constant 0 : i32
    return %c0_i32, %c0_i32_0 : i32, i32
  }
  func.func @transform_2(%arg0: i32) -> (i32, i32) {
    %c0_i32 = arith.constant 0 : i32
    %c0_i32_0 = arith.constant 0 : i32
    %c0_i32_1 = arith.constant 0 : i32
    return %c0_i32, %c0_i32_0 : i32, i32
  }
  func.func @transform_3(%arg0: i32) -> (i32, i32) {
    %c0_i32 = arith.constant 0 : i32
    %c0_i32_0 = arith.constant 0 : i32
    %c0_i32_1 = arith.constant 0 : i32
    return %c0_i32, %c0_i32_0 : i32, i32
  }
  func.func @transform_4(%arg0: i32) -> (i32, i32) {
    %c0_i32 = arith.constant 0 : i32
    %c0_i32_0 = arith.constant 0 : i32
    %c0_i32_1 = arith.constant 0 : i32
    return %c0_i32, %c0_i32_0 : i32, i32
  }
  func.func @transform_5(%arg0: i32) -> (i32, i32) {
    %c0_i32 = arith.constant 0 : i32
    %c0_i32_0 = arith.constant 0 : i32
    %c0_i32_1 = arith.constant 0 : i32
    return %c0_i32, %c0_i32_0 : i32, i32
  }
  func.func @transform_6(%arg0: i32) -> (i32, i32) {
    %c0_i32 = arith.constant 0 : i32
    %c0_i32_0 = arith.constant 0 : i32
    %c0_i32_1 = arith.constant 0 : i32
    return %c0_i32, %c0_i32_0 : i32, i32
  }
}

</mosaic_0001>

<llo_original>
// kernel: tpu_custom_call.1
$region0: #{tpu_custom_call.1}
  #allocation0 [shape = 'u32[]', space=smem, size = 0x4, offset = 0x4, fixed_abs, tag = 'smem constant byte address 0x4 - core index']
  #allocation1 [shape = 'u32[144,128]{1,0:T(1,128)}', space=vmem, size = 0x12000, scoped, tag = 'internal scratch']
  %s0 = inlined_call_operand.hbm [shape: bf16[128,128], index: 0, kind: input, shape index: {}]
  %s1 = inlined_call_operand.hbm [shape: bf16[128,128], index: 1, kind: input, shape index: {}]
  %s2 = inlined_call_operand.hbm [shape: bf16[128,128], index: 2, kind: input, shape index: {}]
  %s3 = inlined_call_operand.vmem [shape: f32[1,128], index: 3, kind: input, shape index: {}]
  %s4 = inlined_call_operand.hbm [shape: bf16[128,128], index: 4, kind: input, shape index: {}]
  %s5 = inlined_call_operand.vmem [shape: f32[1,128], index: 5, kind: input, shape index: {}]
  %s6 = inlined_call_operand.hbm [shape: f32[128,128], index: 6, kind: output, shape index: {}]
  %s7 = sld [smem:[#allocation0]]
  $region50: #{tpu_custom_call.1} parent=0
    _
  %s9 = ssub.s32 1, %s7
  %s10 = scalar_select 0, %s9, %s7
  $region1: #{tpu_custom_call.1} parent=0
    #allocation2 [shape = 'u8[32768]{0}', space=vmem, size = 0x8000, scoped, tag = 'input window, operand 0, single buffered']
    #allocation3 [shape = 's32[1]{0}', space=sflag, size = 0x4, scoped, tag = 'scoped memory for tpu_custom_call.1']
    #allocation4 [shape = 's32[1]{0}', space=sflag, size = 0x4, scoped, tag = 'scoped memory for tpu_custom_call.1']
    #allocation5 [shape = 'u8[32768]{0}', space=vmem, size = 0x8000, scoped, tag = 'input window, operand 1, single buffered']
    #allocation6 [shape = 's32[1]{0}', space=sflag, size = 0x4, scoped, tag = 'scoped memory for tpu_custom_call.1']
    #allocation7 [shape = 'u8[32768]{0}', space=vmem, size = 0x8000, scoped, tag = 'input window, operand 2, single buffered']
    #allocation8 [shape = 'u8[32768]{0}', space=vmem, size = 0x8000, scoped, tag = 'input window, operand 4, single buffered']
    #allocation9 [shape = 's32[1]{0}', space=sflag, size = 0x4, scoped, tag = 'scoped memory for tpu_custom_call.1']
    #allocation10 [shape = 'u8[65536]{0}', space=vmem, size = 0x10000, scoped, tag = 'output window, operand 0, single buffered']
    %11 = vsyncpa [#allocation3], 0
    %12 = vsyncpa [#allocation6], 0
    %13 = vsyncpa [#allocation9], 0
    %14 = vsyncpa [#allocation4], 0
    // Predicated region
    $region2: #{tpu_custom_call.1} parent=1 // pred_check
      _
    $region3: #{tpu_custom_call.1} parent=1 // pred_check_branch
      %16 = sbr.rel (0) target = $region5
    $region4: #{tpu_custom_call.1} parent=1 // pred_region
      %s18 = ssub.s32 1024, 1024
      %19 = vsyncadd [#allocation3], %s18
      %s20 = sshll.u32 [#allocation2], 4
      %s21 = int_to_ptr.vmem [resolvable:$true] %s20
      %26 = dma.hbm_to_vmem [thread:$0]  %s0, 1024, %s21, [#allocation3], 64, 64, 4
    $region5: #{tpu_custom_call.1} parent=1 // pred_fallthru
      _
    // Predicated region
    $region6: #{tpu_custom_call.1} parent=1 // pred_check
      _
    $region7: #{tpu_custom_call.1} parent=1 // pred_check_branch
      %28 = sbr.rel (0) target = $region9
    $region8: #{tpu_custom_call.1} parent=1 // pred_region
      %s30 = ssub.s32 1024, 1024
      %31 = vsyncadd [#allocation6], %s30
      %s32 = sshll.u32 [#allocation5], 4
      %s33 = int_to_ptr.vmem [resolvable:$true] %s32
      %38 = dma.hbm_to_vmem [thread:$0]  %s1, 1024, %s33, [#allocation6], 64, 64, 4
    $region9: #{tpu_custom_call.1} parent=1 // pred_fallthru
      _
    // Predicated region
    $region10: #{tpu_custom_call.1} parent=1 // pred_check
      _
    $region11: #{tpu_custom_call.1} parent=1 // pred_check_branch
      %40 = sbr.rel (0) target = $region13
    $region12: #{tpu_custom_call.1} parent=1 // pred_region
      %s42 = ssub.s32 1024, 1024
      %43 = vsyncadd [#allocation6], %s42
      %s44 = sshll.u32 [#allocation7], 4
      %s45 = int_to_ptr.vmem [resolvable:$true] %s44
      %50 = dma.hbm_to_vmem [thread:$0]  %s2, 1024, %s45, [#allocation6], 64, 64, 4
    $region13: #{tpu_custom_call.1} parent=1 // pred_fallthru
      _
    // Predicated region
    $region14: #{tpu_custom_call.1} parent=1 // pred_check
      _
    $region15: #{tpu_custom_call.1} parent=1 // pred_check_branch
      %52 = sbr.rel (0) target = $region17
    $region16: #{tpu_custom_call.1} parent=1 // pred_region
      _
    $region17: #{tpu_custom_call.1} parent=1 // pred_fallthru
      _
    // Predicated region
    $region18: #{tpu_custom_call.1} parent=1 // pred_check
      _
    $region19: #{tpu_custom_call.1} parent=1 // pred_check_branch
      %54 = sbr.rel (0) target = $region21
    $region20: #{tpu_custom_call.1} parent=1 // pred_region
      %s56 = ssub.s32 1024, 1024
      %57 = vsyncadd [#allocation9], %s56
      %s58 = sshll.u32 [#allocation8], 4
      %s59 = int_to_ptr.vmem [resolvable:$true] %s58
      %64 = dma.hbm_to_vmem [thread:$0]  %s4, 1024, %s59, [#allocation9], 64, 64, 4
    $region21: #{tpu_custom_call.1} parent=1 // pred_fallthru
      _
    // Predicated region
    $region22: #{tpu_custom_call.1} parent=1 // pred_check
      _
    $region23: #{tpu_custom_call.1} parent=1 // pred_check_branch
      %66 = sbr.rel (0) target = $region25
    $region24: #{tpu_custom_call.1} parent=1 // pred_region
      _
    $region25: #{tpu_custom_call.1} parent=1 // pred_fallthru
      _
    // Predicated region
    $region26: #{tpu_custom_call.1} parent=1 // pred_check
      _
    $region27: #{tpu_custom_call.1} parent=1 // pred_check_branch
      %68 = sbr.rel (0) target = $region29
    $region28: #{tpu_custom_call.1} parent=1 // pred_region
      %69 = dma.done [#allocation3], 1024
    $region29: #{tpu_custom_call.1} parent=1 // pred_fallthru
      _
    // Predicated region
    $region30: #{tpu_custom_call.1} parent=1 // pred_check
      _
    $region31: #{tpu_custom_call.1} parent=1 // pred_check_branch
      %71 = sbr.rel (0) target = $region33
    $region32: #{tpu_custom_call.1} parent=1 // pred_region
      %72 = dma.done [#allocation6], 1024
    $region33: #{tpu_custom_call.1} parent=1 // pred_fallthru
      _
    // Predicated region
    $region34: #{tpu_custom_call.1} parent=1 // pred_check
      _
    $region35: #{tpu_custom_call.1} parent=1 // pred_check_branch
      %74 = sbr.rel (0) target = $region37
    $region36: #{tpu_custom_call.1} parent=1 // pred_region
      %75 = dma.done [#allocation6], 1024
    $region37: #{tpu_custom_call.1} parent=1 // pred_fallthru
      _
    // Predicated region
    $region38: #{tpu_custom_call.1} parent=1 // pred_check
      _
    $region39: #{tpu_custom_call.1} parent=1 // pred_check_branch
      %77 = sbr.rel (0) target = $region41
    $region40: #{tpu_custom_call.1} parent=1 // pred_region
      %78 = dma.done [#allocation9], 1024
    $region41: #{tpu_custom_call.1} parent=1 // pred_fallthru
      _
    %v80 = vld [vmem:[#allocation2] sm:$0xf]
    %v81 = vld [vmem:[#allocation2 + $0x4] sm:$0xf]
    %v82 = vld [vmem:[#allocation2 + $0x8] sm:$0xf]
    %v83 = vld [vmem:[#allocation2 + $0xc] sm:$0xf]
    %v84 = vld [vmem:[#allocation2 + $0x10] sm:$0xf]
    %v85 = vld [vmem:[#allocation2 + $0x14] sm:$0xf]
    %v86 = vld [vmem:[#allocation2 + $0x18] sm:$0xf]
    %v87 = vld [vmem:[#allocation2 + $0x1c] sm:$0xf]
    %v88 = vld [vmem:[#allocation2 + $0x20] sm:$0xf]
    %v89 = vld [vmem:[#allocation2 + $0x24] sm:$0xf]
    %v90 = vld [vmem:[#allocation2 + $0x28] sm:$0xf]
    %v91 = vld [vmem:[#allocation2 + $0x2c] sm:$0xf]
    %v92 = vld [vmem:[#allocation2 + $0x30] sm:$0xf]
    %v93 = vld [vmem:[#allocation2 + $0x34] sm:$0xf]
    %v94 = vld [vmem:[#allocation2 + $0x38] sm:$0xf]
    %v95 = vld [vmem:[#allocation2 + $0x3c] sm:$0xf]
    %v96 = vld [vmem:[#allocation5] sm:$0xf]
    %v97 = vld [vmem:[#allocation5 + $0x4] sm:$0xf]
    %v98 = vld [vmem:[#allocation5 + $0x8] sm:$0xf]
    %v99 = vld [vmem:[#allocation5 + $0xc] sm:$0xf]
    %v100 = vld [vmem:[#allocation5 + $0x10] sm:$0xf]
    %v101 = vld [vmem:[#allocation5 + $0x14] sm:$0xf]
    %v102 = vld [vmem:[#allocation5 + $0x18] sm:$0xf]
    %v103 = vld [vmem:[#allocation5 + $0x1c] sm:$0xf]
    %v104 = vld [vmem:[#allocation5 + $0x20] sm:$0xf]
    %v105 = vld [vmem:[#allocation5 + $0x24] sm:$0xf]
    %v106 = vld [vmem:[#allocation5 + $0x28] sm:$0xf]
    %v107 = vld [vmem:[#allocation5 + $0x2c] sm:$0xf]
    %v108 = vld [vmem:[#allocation5 + $0x30] sm:$0xf]
    %v109 = vld [vmem:[#allocation5 + $0x34] sm:$0xf]
    %v110 = vld [vmem:[#allocation5 + $0x38] sm:$0xf]
    %v111 = vld [vmem:[#allocation5 + $0x3c] sm:$0xf]
    %v112 = vld [vmem:[#allocation7] sm:$0xf]
    %v113 = vld [vmem:[#allocation7 + $0x4] sm:$0xf]
    %v114 = vld [vmem:[#allocation7 + $0x8] sm:$0xf]
    %v115 = vld [vmem:[#allocation7 + $0xc] sm:$0xf]
    %v116 = vld [vmem:[#allocation7 + $0x10] sm:$0xf]
    %v117 = vld [vmem:[#allocation7 + $0x14] sm:$0xf]
    %v118 = vld [vmem:[#allocation7 + $0x18] sm:$0xf]
    %v119 = vld [vmem:[#allocation7 + $0x1c] sm:$0xf]
    %v120 = vld [vmem:[#allocation7 + $0x20] sm:$0xf]
    %v121 = vld [vmem:[#allocation7 + $0x24] sm:$0xf]
    %v122 = vld [vmem:[#allocation7 + $0x28] sm:$0xf]
    %v123 = vld [vmem:[#allocation7 + $0x2c] sm:$0xf]
    %v124 = vld [vmem:[#allocation7 + $0x30] sm:$0xf]
    %v125 = vld [vmem:[#allocation7 + $0x34] sm:$0xf]
    %v126 = vld [vmem:[#allocation7 + $0x38] sm:$0xf]
    %v127 = vld [vmem:[#allocation7 + $0x3c] sm:$0xf]
    %v128 = vld [vmem:[%s3] sm:$0x1]
    %v145 = vunpack.c.l.b16 %v96
    %v146 = vunpack.c.l.b16 %v97
    %v147 = vunpack.c.l.b16 %v98
    %v148 = vunpack.c.l.b16 %v99
    %v149 = vunpack.c.l.b16 %v100
    %v150 = vunpack.c.l.b16 %v101
    %v151 = vunpack.c.l.b16 %v102
    %v152 = vunpack.c.l.b16 %v103
    %v153 = vunpack.c.l.b16 %v104
    %v154 = vunpack.c.l.b16 %v105
    %v155 = vunpack.c.l.b16 %v106
    %v156 = vunpack.c.l.b16 %v107
    %v157 = vunpack.c.l.b16 %v108
    %v158 = vunpack.c.l.b16 %v109
    %v159 = vunpack.c.l.b16 %v110
    %v160 = vunpack.c.l.b16 %v111
    %v161 = vpack.c.b16 %v146, %v145
    %v162 = vpack.c.b16 %v148, %v147
    %v163 = vpack.c.b16 %v150, %v149
    %v164 = vpack.c.b16 %v152, %v151
    %v165 = vpack.c.b16 %v154, %v153
    %v166 = vpack.c.b16 %v156, %v155
    %v167 = vpack.c.b16 %v158, %v157
    %v168 = vpack.c.b16 %v160, %v159
    %v193 = vunpack.c.l.b16 %v112
    %v194 = vunpack.c.l.b16 %v113
    %v195 = vunpack.c.l.b16 %v114
    %v196 = vunpack.c.l.b16 %v115
    %v197 = vunpack.c.l.b16 %v116
    %v198 = vunpack.c.l.b16 %v117
    %v199 = vunpack.c.l.b16 %v118
    %v200 = vunpack.c.l.b16 %v119
    %v201 = vunpack.c.l.b16 %v120
    %v202 = vunpack.c.l.b16 %v121
    %v203 = vunpack.c.l.b16 %v122
    %v204 = vunpack.c.l.b16 %v123
    %v205 = vunpack.c.l.b16 %v124
    %v206 = vunpack.c.l.b16 %v125
    %v207 = vunpack.c.l.b16 %v126
    %v208 = vunpack.c.l.b16 %v127
    %v209 = vpack.c.b16 %v194, %v193
    %v210 = vpack.c.b16 %v196, %v195
    %v211 = vpack.c.b16 %v198, %v197
    %v212 = vpack.c.b16 %v200, %v199
    %v213 = vpack.c.b16 %v202, %v201
    %v214 = vpack.c.b16 %v204, %v203
    %v215 = vpack.c.b16 %v206, %v205
    %v216 = vpack.c.b16 %v208, %v207
    %225 = vmatprep.subr.bf16.mxu0 0
    %226 = vmatpush1.bf16.msra.mxu0 %v209
    %227 = vmatprep.subr.bf16.mxu0 0
    %228 = vmatpush1.bf16.msra.mxu0 %v210
    %229 = vmatprep.subr.bf16.mxu0 0
    %230 = vmatpush1.bf16.msra.mxu0 %v211
    %231 = vmatprep.subr.bf16.mxu0 0
    %232 = vmatpush1.bf16.msra.mxu0 %v212
    %233 = vmatprep.subr.bf16.mxu0 0
    %234 = vmatpush1.bf16.msra.mxu0 %v213
    %235 = vmatprep.subr.bf16.mxu0 0
    %236 = vmatpush1.bf16.msra.mxu0 %v214
    %237 = vmatprep.subr.bf16.mxu0 0
    %238 = vmatpush1.bf16.msra.mxu0 %v215
    %239 = vmatprep.subr.bf16.mxu0 0
    %240 = vmatpush1.bf16.msra.mxu0 %v216
    %241 = vmatprep.subr.bf16.mxu0 0
    %242 = vmatpush1.bf16.msra.mxu0 0
    %243 = vmatprep.subr.bf16.mxu0 0
    %244 = vmatpush1.bf16.msra.mxu0 0
    %245 = vmatprep.subr.bf16.mxu0 0
    %246 = vmatpush1.bf16.msra.mxu0 0
    %247 = vmatprep.subr.bf16.mxu0 0
    %248 = vmatpush1.bf16.msra.mxu0 0
    %249 = vmatprep.subr.bf16.mxu0 0
    %250 = vmatpush1.bf16.msra.mxu0 0
    %251 = vmatprep.subr.bf16.mxu0 0
    %252 = vmatpush1.bf16.msra.mxu0 0
    %253 = vmatprep.subr.bf16.mxu0 0
    %254 = vmatpush1.bf16.msra.mxu0 0
    %255 = vmatprep.subr.bf16.mxu0 0
    %256 = vmatpush1.bf16.msra.mxu0 0
    %257 = vmatprep.mubr.bf16.mxu0 0
    %258 = vmatmul.mubr.bf16.gmra.mrb[0].mxu0 %v161
    %v259 = vpop.f32.mrb[0].mxu0
    %v260 = vadd.f32 0.0, %v259
    %v261 = vpop.f32.mrb[0].mxu0
    %v262 = vpop.f32.mrb[0].mxu0
    %v263 = vadd.f32 0.0, %v262
    %v264 = vpop.f32.mrb[0].mxu0
    %265 = vmatprep.mubr.bf16.mxu0 0
    %266 = vmatmul.mubr.bf16.gmra.mrb[0].mxu0 %v162
    %v267 = vpop.f32.mrb[0].mxu0
    %v268 = vadd.f32 0.0, %v267
    %v269 = vpop.f32.mrb[0].mxu0
    %v270 = vpop.f32.mrb[0].mxu0
    %v271 = vadd.f32 0.0, %v270
    %v272 = vpop.f32.mrb[0].mxu0
    %273 = vmatprep.mubr.bf16.mxu0 0
    %274 = vmatmul.mubr.bf16.gmra.mrb[0].mxu0 %v163
    %v275 = vpop.f32.mrb[0].mxu0
    %v276 = vadd.f32 0.0, %v275
    %v277 = vpop.f32.mrb[0].mxu0
    %v278 = vpop.f32.mrb[0].mxu0
    %v279 = vadd.f32 0.0, %v278
    %v280 = vpop.f32.mrb[0].mxu0
    %281 = vmatprep.mubr.bf16.mxu0 0
    %282 = vmatmul.mubr.bf16.gmra.mrb[0].mxu0 %v164
    %v283 = vpop.f32.mrb[0].mxu0
    %v284 = vadd.f32 0.0, %v283
    %v285 = vpop.f32.mrb[0].mxu0
    %v286 = vpop.f32.mrb[0].mxu0
    %v287 = vadd.f32 0.0, %v286
    %v288 = vpop.f32.mrb[0].mxu0
    %289 = vmatprep.mubr.bf16.mxu0 0
    %290 = vmatmul.mubr.bf16.gmra.mrb[0].mxu0 %v165
    %v291 = vpop.f32.mrb[0].mxu0
    %v292 = vadd.f32 0.0, %v291
    %v293 = vpop.f32.mrb[0].mxu0
    %v294 = vpop.f32.mrb[0].mxu0
    %v295 = vadd.f32 0.0, %v294
    %v296 = vpop.f32.mrb[0].mxu0
    %297 = vmatprep.mubr.bf16.mxu0 0
    %298 = vmatmul.mubr.bf16.gmra.mrb[0].mxu0 %v166
    %v299 = vpop.f32.mrb[0].mxu0
    %v300 = vadd.f32 0.0, %v299
    %v301 = vpop.f32.mrb[0].mxu0
    %v302 = vpop.f32.mrb[0].mxu0
    %v303 = vadd.f32 0.0, %v302
    %v304 = vpop.f32.mrb[0].mxu0
    %305 = vmatprep.mubr.bf16.mxu0 0
    %306 = vmatmul.mubr.bf16.gmra.mrb[0].mxu0 %v167
    %v307 = vpop.f32.mrb[0].mxu0
    %v308 = vadd.f32 0.0, %v307
    %v309 = vpop.f32.mrb[0].mxu0
    %v310 = vpop.f32.mrb[0].mxu0
    %v311 = vadd.f32 0.0, %v310
    %v312 = vpop.f32.mrb[0].mxu0
    %313 = vmatprep.mubr.bf16.mxu0 0
    %314 = vmatmul.mubr.bf16.gmra.mrb[0].mxu0 %v168
    %v315 = vpop.f32.mrb[0].mxu0
    %v316 = vadd.f32 0.0, %v315
    %v317 = vpop.f32.mrb[0].mxu0
    %v318 = vpop.f32.mrb[0].mxu0
    %v319 = vadd.f32 0.0, %v318
    %v320 = vpop.f32.mrb[0].mxu0
    %321 = vdwg.mxu0
    %v322 = vpack.c.bf16 %v263, %v260
    %v323 = vpack.c.bf16 %v271, %v268
    %v324 = vpack.c.bf16 %v279, %v276
    %v325 = vpack.c.bf16 %v287, %v284
    %v326 = vpack.c.bf16 %v295, %v292
    %v327 = vpack.c.bf16 %v303, %v300
    %v328 = vpack.c.bf16 %v311, %v308
    %v329 = vpack.c.bf16 %v319, %v316
    %v331 = vlaneseq
    %v332 = vshrl.u32 %v331, 7
    %v333 = vsub.s32 0, %v332
    %v334 = vrot.slane %v128, %v333
    %v352 = vunpack.c.l.b16 %v80
    %v353 = vunpack.c.l.b16 %v81
    %v354 = vunpack.c.l.b16 %v82
    %v355 = vunpack.c.l.b16 %v83
    %v356 = vunpack.c.l.b16 %v84
    %v357 = vunpack.c.l.b16 %v85
    %v358 = vunpack.c.l.b16 %v86
    %v359 = vunpack.c.l.b16 %v87
    %v360 = vunpack.c.l.b16 %v88
    %v361 = vunpack.c.l.b16 %v89
    %v362 = vunpack.c.l.b16 %v90
    %v363 = vunpack.c.l.b16 %v91
    %v364 = vunpack.c.l.b16 %v92
    %v365 = vunpack.c.l.b16 %v93
    %v366 = vunpack.c.l.b16 %v94
    %v367 = vunpack.c.l.b16 %v95
    %v368 = vpack.c.b16 %v353, %v352
    %v369 = vpack.c.b16 %v355, %v354
    %v370 = vpack.c.b16 %v357, %v356
    %v371 = vpack.c.b16 %v359, %v358
    %v372 = vpack.c.b16 %v361, %v360
    %v373 = vpack.c.b16 %v363, %v362
    %v374 = vpack.c.b16 %v365, %v364
    %v375 = vpack.c.b16 %v367, %v366
    %384 = vmatprep.subr.bf16.mxu0 0
    %385 = vmatpush1.bf16.msra.mxu0 %v322
    %386 = vmatprep.subr.bf16.mxu0 0
    %387 = vmatpush1.bf16.msra.mxu0 %v323
    %388 = vmatprep.subr.bf16.mxu0 0
    %389 = vmatpush1.bf16.msra.mxu0 %v324
    %390 = vmatprep.subr.bf16.mxu0 0
    %391 = vmatpush1.bf16.msra.mxu0 %v325
    %392 = vmatprep.subr.bf16.mxu0 0
    %393 = vmatpush1.bf16.msra.mxu0 %v326
    %394 = vmatprep.subr.bf16.mxu0 0
    %395 = vmatpush1.bf16.msra.mxu0 %v327
    %396 = vmatprep.subr.bf16.mxu0 0
    %397 = vmatpush1.bf16.msra.mxu0 %v328
    %398 = vmatprep.subr.bf16.mxu0 0
    %399 = vmatpush1.bf16.msra.mxu0 %v329
    %400 = vmatprep.subr.bf16.mxu0 0
    %401 = vmatpush1.bf16.msra.mxu0 0
    %402 = vmatprep.subr.bf16.mxu0 0
    %403 = vmatpush1.bf16.msra.mxu0 0
    %404 = vmatprep.subr.bf16.mxu0 0
    %405 = vmatpush1.bf16.msra.mxu0 0
    %406 = vmatprep.subr.bf16.mxu0 0
    %407 = vmatpush1.bf16.msra.mxu0 0
    %408 = vmatprep.subr.bf16.mxu0 0
    %409 = vmatpush1.bf16.msra.mxu0 0
    %410 = vmatprep.subr.bf16.mxu0 0
    %411 = vmatpush1.bf16.msra.mxu0 0
    %412 = vmatprep.subr.bf16.mxu0 0
    %413 = vmatpush1.bf16.msra.mxu0 0
    %414 = vmatprep.subr.bf16.mxu0 0
    %415 = vmatpush1.bf16.msra.mxu0 0
    %416 = vmatprep.mubr.bf16.mxu0 0
    %417 = vmatmul.mubr.bf16.gmra.mrb[0].mxu0 %v368
    %v418 = vpop.f32.mrb[0].mxu0
    %v419 = vadd.f32 %v334, %v418
    %v420 = vpop.f32.mrb[0].mxu0
    %v421 = vpop.f32.mrb[0].mxu0
    %v422 = vadd.f32 %v334, %v421
    %v423 = vpop.f32.mrb[0].mxu0
    %424 = vmatprep.mubr.bf16.mxu0 0
    %425 = vmatmul.mubr.bf16.gmra.mrb[0].mxu0 %v369
    %v426 = vpop.f32.mrb[0].mxu0
    %v427 = vadd.f32 %v334, %v426
    %v428 = vpop.f32.mrb[0].mxu0
    %v429 = vpop.f32.mrb[0].mxu0
    %v430 = vadd.f32 %v334, %v429
    %v431 = vpop.f32.mrb[0].mxu0
    %432 = vmatprep.mubr.bf16.mxu0 0
    %433 = vmatmul.mubr.bf16.gmra.mrb[0].mxu0 %v370
    %v434 = vpop.f32.mrb[0].mxu0
    %v435 = vadd.f32 %v334, %v434
    %v436 = vpop.f32.mrb[0].mxu0
    %v437 = vpop.f32.mrb[0].mxu0
    %v438 = vadd.f32 %v334, %v437
    %v439 = vpop.f32.mrb[0].mxu0
    %440 = vmatprep.mubr.bf16.mxu0 0
    %441 = vmatmul.mubr.bf16.gmra.mrb[0].mxu0 %v371
    %v442 = vpop.f32.mrb[0].mxu0
    %v443 = vadd.f32 %v334, %v442
    %v444 = vpop.f32.mrb[0].mxu0
    %v445 = vpop.f32.mrb[0].mxu0
    %v446 = vadd.f32 %v334, %v445
    %v447 = vpop.f32.mrb[0].mxu0
    %448 = vmatprep.mubr.bf16.mxu0 0
    %449 = vmatmul.mubr.bf16.gmra.mrb[0].mxu0 %v372
    %v450 = vpop.f32.mrb[0].mxu0
    %v451 = vadd.f32 %v334, %v450
    %v452 = vpop.f32.mrb[0].mxu0
    %v453 = vpop.f32.mrb[0].mxu0
    %v454 = vadd.f32 %v334, %v453
    %v455 = vpop.f32.mrb[0].mxu0
    %456 = vmatprep.mubr.bf16.mxu0 0
    %457 = vmatmul.mubr.bf16.gmra.mrb[0].mxu0 %v373
    %v458 = vpop.f32.mrb[0].mxu0
    %v459 = vadd.f32 %v334, %v458
    %v460 = vpop.f32.mrb[0].mxu0
    %v461 = vpop.f32.mrb[0].mxu0
    %v462 = vadd.f32 %v334, %v461
    %v463 = vpop.f32.mrb[0].mxu0
    %464 = vmatprep.mubr.bf16.mxu0 0
    %465 = vmatmul.mubr.bf16.gmra.mrb[0].mxu0 %v374
    %v466 = vpop.f32.mrb[0].mxu0
    %v467 = vadd.f32 %v334, %v466
    %v468 = vpop.f32.mrb[0].mxu0
    %v469 = vpop.f32.mrb[0].mxu0
    %v470 = vadd.f32 %v334, %v469
    %v471 = vpop.f32.mrb[0].mxu0
    %472 = vmatprep.mubr.bf16.mxu0 0
    %473 = vmatmul.mubr.bf16.gmra.mrb[0].mxu0 %v375
    %v474 = vpop.f32.mrb[0].mxu0
    %v475 = vadd.f32 %v334, %v474
    %v476 = vpop.f32.mrb[0].mxu0
    %v477 = vpop.f32.mrb[0].mxu0
    %v478 = vadd.f32 %v334, %v477
    %v479 = vpop.f32.mrb[0].mxu0
    %480 = vdwg.mxu0
    %v481 = vmax.f32 %v419, 0.0
    %v482 = vmax.f32 %v422, 0.0
    %v483 = vmax.f32 %v427, 0.0
    %v484 = vmax.f32 %v430, 0.0
    %v485 = vmax.f32 %v435, 0.0
    %v486 = vmax.f32 %v438, 0.0
    %v487 = vmax.f32 %v443, 0.0
    %v488 = vmax.f32 %v446, 0.0
    %v489 = vmax.f32 %v451, 0.0
    %v490 = vmax.f32 %v454, 0.0
    %v491 = vmax.f32 %v459, 0.0
    %v492 = vmax.f32 %v462, 0.0
    %v493 = vmax.f32 %v467, 0.0
    %v494 = vmax.f32 %v470, 0.0
    %v495 = vmax.f32 %v475, 0.0
    %v496 = vmax.f32 %v478, 0.0
    %v497 = vpack.c.bf16 %v482, %v481
    %v498 = vpack.c.bf16 %v484, %v483
    %v499 = vpack.c.bf16 %v486, %v485
    %v500 = vpack.c.bf16 %v488, %v487
    %v501 = vpack.c.bf16 %v490, %v489
    %v502 = vpack.c.bf16 %v492, %v491
    %v503 = vpack.c.bf16 %v494, %v493
    %v504 = vpack.c.bf16 %v496, %v495
    %v505 = vld [vmem:[#allocation8] sm:$0xf]
    %v506 = vld [vmem:[#allocation8 + $0x4] sm:$0xf]
    %v507 = vld [vmem:[#allocation8 + $0x8] sm:$0xf]
    %v508 = vld [vmem:[#allocation8 + $0xc] sm:$0xf]
    %v509 = vld [vmem:[#allocation8 + $0x10] sm:$0xf]
    %v510 = vld [vmem:[#allocation8 + $0x14] sm:$0xf]
    %v511 = vld [vmem:[#allocation8 + $0x18] sm:$0xf]
    %v512 = vld [vmem:[#allocation8 + $0x1c] sm:$0xf]
    %v513 = vld [vmem:[#allocation8 + $0x20] sm:$0xf]
    %v514 = vld [vmem:[#allocation8 + $0x24] sm:$0xf]
    %v515 = vld [vmem:[#allocation8 + $0x28] sm:$0xf]
    %v516 = vld [vmem:[#allocation8 + $0x2c] sm:$0xf]
    %v517 = vld [vmem:[#allocation8 + $0x30] sm:$0xf]
    %v518 = vld [vmem:[#allocation8 + $0x34] sm:$0xf]
    %v519 = vld [vmem:[#allocation8 + $0x38] sm:$0xf]
    %v520 = vld [vmem:[#allocation8 + $0x3c] sm:$0xf]
    %v521 = vld [vmem:[%s5] sm:$0x1]
    %v538 = vunpack.c.l.b16 %v505
    %v539 = vunpack.c.l.b16 %v506
    %v540 = vunpack.c.l.b16 %v507
    %v541 = vunpack.c.l.b16 %v508
    %v542 = vunpack.c.l.b16 %v509
    %v543 = vunpack.c.l.b16 %v510
    %v544 = vunpack.c.l.b16 %v511
    %v545 = vunpack.c.l.b16 %v512
    %v546 = vunpack.c.l.b16 %v513
    %v547 = vunpack.c.l.b16 %v514
    %v548 = vunpack.c.l.b16 %v515
    %v549 = vunpack.c.l.b16 %v516
    %v550 = vunpack.c.l.b16 %v517
    %v551 = vunpack.c.l.b16 %v518
    %v552 = vunpack.c.l.b16 %v519
    %v553 = vunpack.c.l.b16 %v520
    %v554 = vpack.c.b16 %v539, %v538
    %v555 = vpack.c.b16 %v541, %v540
    %v556 = vpack.c.b16 %v543, %v542
    %v557 = vpack.c.b16 %v545, %v544
    %v558 = vpack.c.b16 %v547, %v546
    %v559 = vpack.c.b16 %v549, %v548
    %v560 = vpack.c.b16 %v551, %v550
    %v561 = vpack.c.b16 %v553, %v552
    %570 = vmatprep.subr.bf16.mxu0 0
    %571 = vmatpush1.bf16.msra.mxu0 %v554
    %572 = vmatprep.subr.bf16.mxu0 0
    %573 = vmatpush1.bf16.msra.mxu0 %v555
    %574 = vmatprep.subr.bf16.mxu0 0
    %575 = vmatpush1.bf16.msra.mxu0 %v556
    %576 = vmatprep.subr.bf16.mxu0 0
    %577 = vmatpush1.bf16.msra.mxu0 %v557
    %578 = vmatprep.subr.bf16.mxu0 0
    %579 = vmatpush1.bf16.msra.mxu0 %v558
    %580 = vmatprep.subr.bf16.mxu0 0
    %581 = vmatpush1.bf16.msra.mxu0 %v559
    %582 = vmatprep.subr.bf16.mxu0 0
    %583 = vmatpush1.bf16.msra.mxu0 %v560
    %584 = vmatprep.subr.bf16.mxu0 0
    %585 = vmatpush1.bf16.msra.mxu0 %v561
    %586 = vmatprep.subr.bf16.mxu0 0
    %587 = vmatpush1.bf16.msra.mxu0 0
    %588 = vmatprep.subr.bf16.mxu0 0
    %589 = vmatpush1.bf16.msra.mxu0 0
    %590 = vmatprep.subr.bf16.mxu0 0
    %591 = vmatpush1.bf16.msra.mxu0 0
    %592 = vmatprep.subr.bf16.mxu0 0
    %593 = vmatpush1.bf16.msra.mxu0 0
    %594 = vmatprep.subr.bf16.mxu0 0
    %595 = vmatpush1.bf16.msra.mxu0 0
    %596 = vmatprep.subr.bf16.mxu0 0
    %597 = vmatpush1.bf16.msra.mxu0 0
    %598 = vmatprep.subr.bf16.mxu0 0
    %599 = vmatpush1.bf16.msra.mxu0 0
    %600 = vmatprep.subr.bf16.mxu0 0
    %601 = vmatpush1.bf16.msra.mxu0 0
    %602 = vmatprep.mubr.bf16.mxu0 0
    %603 = vmatmul.mubr.bf16.gmra.mrb[0].mxu0 %v497
    %v604 = vpop.f32.mrb[0].mxu0
    %v605 = vadd.f32 0.0, %v604
    %v606 = vpop.f32.mrb[0].mxu0
    %v607 = vpop.f32.mrb[0].mxu0
    %v608 = vadd.f32 0.0, %v607
    %v609 = vpop.f32.mrb[0].mxu0
    %610 = vmatprep.mubr.bf16.mxu0 0
    %611 = vmatmul.mubr.bf16.gmra.mrb[0].mxu0 %v498
    %v612 = vpop.f32.mrb[0].mxu0
    %v613 = vadd.f32 0.0, %v612
    %v614 = vpop.f32.mrb[0].mxu0
    %v615 = vpop.f32.mrb[0].mxu0
    %v616 = vadd.f32 0.0, %v615
    %v617 = vpop.f32.mrb[0].mxu0
    %618 = vmatprep.mubr.bf16.mxu0 0
    %619 = vmatmul.mubr.bf16.gmra.mrb[0].mxu0 %v499
    %v620 = vpop.f32.mrb[0].mxu0
    %v621 = vadd.f32 0.0, %v620
    %v622 = vpop.f32.mrb[0].mxu0
    %v623 = vpop.f32.mrb[0].mxu0
    %v624 = vadd.f32 0.0, %v623
    %v625 = vpop.f32.mrb[0].mxu0
    %626 = vmatprep.mubr.bf16.mxu0 0
    %627 = vmatmul.mubr.bf16.gmra.mrb[0].mxu0 %v500
    %v628 = vpop.f32.mrb[0].mxu0
    %v629 = vadd.f32 0.0, %v628
    %v630 = vpop.f32.mrb[0].mxu0
    %v631 = vpop.f32.mrb[0].mxu0
    %v632 = vadd.f32 0.0, %v631
    %v633 = vpop.f32.mrb[0].mxu0
    %634 = vmatprep.mubr.bf16.mxu0 0
    %635 = vmatmul.mubr.bf16.gmra.mrb[0].mxu0 %v501
    %v636 = vpop.f32.mrb[0].mxu0
    %v637 = vadd.f32 0.0, %v636
    %v638 = vpop.f32.mrb[0].mxu0
    %v639 = vpop.f32.mrb[0].mxu0
    %v640 = vadd.f32 0.0, %v639
    %v641 = vpop.f32.mrb[0].mxu0
    %642 = vmatprep.mubr.bf16.mxu0 0
    %643 = vmatmul.mubr.bf16.gmra.mrb[0].mxu0 %v502
    %v644 = vpop.f32.mrb[0].mxu0
    %v645 = vadd.f32 0.0, %v644
    %v646 = vpop.f32.mrb[0].mxu0
    %v647 = vpop.f32.mrb[0].mxu0
    %v648 = vadd.f32 0.0, %v647
    %v649 = vpop.f32.mrb[0].mxu0
    %650 = vmatprep.mubr.bf16.mxu0 0
    %651 = vmatmul.mubr.bf16.gmra.mrb[0].mxu0 %v503
    %v652 = vpop.f32.mrb[0].mxu0
    %v653 = vadd.f32 0.0, %v652
    %v654 = vpop.f32.mrb[0].mxu0
    %v655 = vpop.f32.mrb[0].mxu0
    %v656 = vadd.f32 0.0, %v655
    %v657 = vpop.f32.mrb[0].mxu0
    %658 = vmatprep.mubr.bf16.mxu0 0
    %659 = vmatmul.mubr.bf16.gmra.mrb[0].mxu0 %v504
    %v660 = vpop.f32.mrb[0].mxu0
    %v661 = vadd.f32 0.0, %v660
    %v662 = vpop.f32.mrb[0].mxu0
    %v663 = vpop.f32.mrb[0].mxu0
    %v664 = vadd.f32 0.0, %v663
    %v665 = vpop.f32.mrb[0].mxu0
    %666 = vdwg.mxu0
    %v667 = vpack.c.bf16 %v608, %v605
    %v668 = vpack.c.bf16 %v616, %v613
    %v669 = vpack.c.bf16 %v624, %v621
    %v670 = vpack.c.bf16 %v632, %v629
    %v671 = vpack.c.bf16 %v640, %v637
    %v672 = vpack.c.bf16 %v648, %v645
    %v673 = vpack.c.bf16 %v656, %v653
    %v674 = vpack.c.bf16 %v664, %v661
    %v676 = vlaneseq
    %v677 = vshrl.u32 %v676, 7
    %v678 = vsub.s32 0, %v677
    %v679 = vrot.slane %v521, %v678
    %681 = vmatprep.subr.bf16.mxu0 0
    %682 = vmatpush1.bf16.msra.mxu0 %v667
    %683 = vmatprep.subr.bf16.mxu0 0
    %684 = vmatpush1.bf16.msra.mxu0 %v668
    %685 = vmatprep.subr.bf16.mxu0 0
    %686 = vmatpush1.bf16.msra.mxu0 %v669
    %687 = vmatprep.subr.bf16.mxu0 0
    %688 = vmatpush1.bf16.msra.mxu0 %v670
    %689 = vmatprep.subr.bf16.mxu0 0
    %690 = vmatpush1.bf16.msra.mxu0 %v671
    %691 = vmatprep.subr.bf16.mxu0 0
    %692 = vmatpush1.bf16.msra.mxu0 %v672
    %693 = vmatprep.subr.bf16.mxu0 0
    %694 = vmatpush1.bf16.msra.mxu0 %v673
    %695 = vmatprep.subr.bf16.mxu0 0
    %696 = vmatpush1.bf16.msra.mxu0 %v674
    %697 = vmatprep.subr.bf16.mxu0 0
    %698 = vmatpush1.bf16.msra.mxu0 0
    %699 = vmatprep.subr.bf16.mxu0 0
    %700 = vmatpush1.bf16.msra.mxu0 0
    %701 = vmatprep.subr.bf16.mxu0 0
    %702 = vmatpush1.bf16.msra.mxu0 0
    %703 = vmatprep.subr.bf16.mxu0 0
    %704 = vmatpush1.bf16.msra.mxu0 0
    %705 = vmatprep.subr.bf16.mxu0 0
    %706 = vmatpush1.bf16.msra.mxu0 0
    %707 = vmatprep.subr.bf16.mxu0 0
    %708 = vmatpush1.bf16.msra.mxu0 0
    %709 = vmatprep.subr.bf16.mxu0 0
    %710 = vmatpush1.bf16.msra.mxu0 0
    %711 = vmatprep.subr.bf16.mxu0 0
    %712 = vmatpush1.bf16.msra.mxu0 0
    %713 = vmatprep.mubr.bf16.mxu0 0
    %714 = vmatmul.mubr.bf16.gmra.mrb[0].mxu0 %v368
    %v715 = vpop.f32.mrb[0].mxu0
    %v716 = vadd.f32 %v679, %v715
    %v717 = vpop.f32.mrb[0].mxu0
    %v718 = vpop.f32.mrb[0].mxu0
    %v719 = vadd.f32 %v679, %v718
    %v720 = vpop.f32.mrb[0].mxu0
    %721 = vmatprep.mubr.bf16.mxu0 0
    %722 = vmatmul.mubr.bf16.gmra.mrb[0].mxu0 %v369
    %v723 = vpop.f32.mrb[0].mxu0
    %v724 = vadd.f32 %v679, %v723
    %v725 = vpop.f32.mrb[0].mxu0
    %v726 = vpop.f32.mrb[0].mxu0
    %v727 = vadd.f32 %v679, %v726
    %v728 = vpop.f32.mrb[0].mxu0
    %729 = vmatprep.mubr.bf16.mxu0 0
    %730 = vmatmul.mubr.bf16.gmra.mrb[0].mxu0 %v370
    %v731 = vpop.f32.mrb[0].mxu0
    %v732 = vadd.f32 %v679, %v731
    %v733 = vpop.f32.mrb[0].mxu0
    %v734 = vpop.f32.mrb[0].mxu0
    %v735 = vadd.f32 %v679, %v734
    %v736 = vpop.f32.mrb[0].mxu0
    %737 = vmatprep.mubr.bf16.mxu0 0
    %738 = vmatmul.mubr.bf16.gmra.mrb[0].mxu0 %v371
    %v739 = vpop.f32.mrb[0].mxu0
    %v740 = vadd.f32 %v679, %v739
    %v741 = vpop.f32.mrb[0].mxu0
    %v742 = vpop.f32.mrb[0].mxu0
    %v743 = vadd.f32 %v679, %v742
    %v744 = vpop.f32.mrb[0].mxu0
    %745 = vmatprep.mubr.bf16.mxu0 0
    %746 = vmatmul.mubr.bf16.gmra.mrb[0].mxu0 %v372
    %v747 = vpop.f32.mrb[0].mxu0
    %v748 = vadd.f32 %v679, %v747
    %v749 = vpop.f32.mrb[0].mxu0
    %v750 = vpop.f32.mrb[0].mxu0
    %v751 = vadd.f32 %v679, %v750
    %v752 = vpop.f32.mrb[0].mxu0
    %753 = vmatprep.mubr.bf16.mxu0 0
    %754 = vmatmul.mubr.bf16.gmra.mrb[0].mxu0 %v373
    %v755 = vpop.f32.mrb[0].mxu0
    %v756 = vadd.f32 %v679, %v755
    %v757 = vpop.f32.mrb[0].mxu0
    %v758 = vpop.f32.mrb[0].mxu0
    %v759 = vadd.f32 %v679, %v758
    %v760 = vpop.f32.mrb[0].mxu0
    %761 = vmatprep.mubr.bf16.mxu0 0
    %762 = vmatmul.mubr.bf16.gmra.mrb[0].mxu0 %v374
    %v763 = vpop.f32.mrb[0].mxu0
    %v764 = vadd.f32 %v679, %v763
    %v765 = vpop.f32.mrb[0].mxu0
    %v766 = vpop.f32.mrb[0].mxu0
    %v767 = vadd.f32 %v679, %v766
    %v768 = vpop.f32.mrb[0].mxu0
    %769 = vmatprep.mubr.bf16.mxu0 0
    %770 = vmatmul.mubr.bf16.gmra.mrb[0].mxu0 %v375
    %v771 = vpop.f32.mrb[0].mxu0
    %v772 = vadd.f32 %v679, %v771
    %v773 = vpop.f32.mrb[0].mxu0
    %v774 = vpop.f32.mrb[0].mxu0
    %v775 = vadd.f32 %v679, %v774
    %v776 = vpop.f32.mrb[0].mxu0
    %777 = vdwg.mxu0
    %778 = vst [vmem:[#allocation10] sm:$0xff] %v716
    %779 = vst [vmem:[#allocation10 + $0x8] sm:$0xff] %v719
    %780 = vst [vmem:[#allocation10 + $0x10] sm:$0xff] %v724
    %781 = vst [vmem:[#allocation10 + $0x18] sm:$0xff] %v727
    %782 = vst [vmem:[#allocation10 + $0x20] sm:$0xff] %v732
    %783 = vst [vmem:[#allocation10 + $0x28] sm:$0xff] %v735
    %784 = vst [vmem:[#allocation10 + $0x30] sm:$0xff] %v740
    %785 = vst [vmem:[#allocation10 + $0x38] sm:$0xff] %v743
    %786 = vst [vmem:[#allocation10 + $0x40] sm:$0xff] %v748
    %787 = vst [vmem:[#allocation10 + $0x48] sm:$0xff] %v751
    %788 = vst [vmem:[#allocation10 + $0x50] sm:$0xff] %v756
    %789 = vst [vmem:[#allocation10 + $0x58] sm:$0xff] %v759
    %790 = vst [vmem:[#allocation10 + $0x60] sm:$0xff] %v764
    %791 = vst [vmem:[#allocation10 + $0x68] sm:$0xff] %v767
    %792 = vst [vmem:[#allocation10 + $0x70] sm:$0xff] %v772
    %793 = vst [vmem:[#allocation10 + $0x78] sm:$0xff] %v775
    // Predicated region
    $region42: #{tpu_custom_call.1} parent=1 // pred_check
      _
    $region43: #{tpu_custom_call.1} parent=1 // pred_check_branch
      %795 = sbr.rel (0) target = $region45
    $region44: #{tpu_custom_call.1} parent=1 // pred_region
      %s797 = ssub.s32 2048, 2048
      %798 = vsyncadd [#allocation4], %s797
      %s799 = sshll.u32 [#allocation10], 4
      %s800 = int_to_ptr.vmem [resolvable:$true] %s799
      %805 = dma.vmem_to_hbm [thread:$0]  %s800, 2048, %s6, [#allocation4], 128, 128, 8
    $region45: #{tpu_custom_call.1} parent=1 // pred_fallthru
      _
    // Predicated region
    $region46: #{tpu_custom_call.1} parent=1 // pred_check
      _
    $region47: #{tpu_custom_call.1} parent=1 // pred_check_branch
      %807 = sbr.rel (0) target = $region49
    $region48: #{tpu_custom_call.1} parent=1 // pred_region
      %808 = dma.done [#allocation4], 2048
    $region49: #{tpu_custom_call.1} parent=1 // pred_fallthru
      _
    %809 = vsyncpa [#allocation3], 1
    %810 = vsyncpa [#allocation6], 1
    %811 = vsyncpa [#allocation9], 1
    %812 = vsyncpa [#allocation4], 1

</llo_original>
